<compile_context>
chip_gen: v6e
topology: v6e:2x2x1
jax: 0.10.0
libtpu: 0.0.40
codegen_flags: <defaults>
</compile_context>

<pallas_src>
import functools

import jax
import jax.numpy as jnp
from jax.experimental import pallas as pl
from jax.experimental.pallas import tpu as pltpu


def feature_embedding_kernel(x_ref, w1bd_ref, b1f_ref, w2f_ref, b2s_ref,
                             out_ref, *, mxu_dtype):
    # x_ref:    (TM, k)       row tile of flattened input (f32)
    # w1bd_ref: (k, k*H)      block-diagonal layer-1 weights (mxu_dtype)
    # b1f_ref:  (1, k*H)      flattened layer-1 biases (f32)
    # w2f_ref:  (k*H, D)      stacked layer-2 weights, feature-major (mxu_dtype)
    # b2s_ref:  (1, D)        sum_i b2_i (f32)
    # out_ref:  (TM, D)
    x = x_ref[...].astype(mxu_dtype)

    # Layer 1 on the MXU (tiny K=k contraction), bias + ReLU in f32 on the VPU.
    h_all = jnp.dot(x, w1bd_ref[...], preferred_element_type=jnp.float32)
    h_all = jnp.maximum(h_all + b1f_ref[...], 0.0)          # (TM, k*H) f32

    # Layer 2: single fused contraction over K = k*H, f32 accumulation.
    acc = jnp.dot(h_all.astype(mxu_dtype), w2f_ref[...],
                  preferred_element_type=jnp.float32)
    acc = acc + b2s_ref[...]                                 # one bias add
    out_ref[...] = acc.astype(out_ref.dtype)


def _cdiv(a, b):
    return -(-a // b)


def _round_up(a, b):
    return _cdiv(a, b) * b


def feature_embedding(x, w1, b1, w2, b2, *, tm_max=4096, min_steps=2,
                      use_bf16=False):
    """x:(N,L,k), w1:(k,h), b1:(k,h), w2:(k,h,d), b2:(k,d) -> (N,L,d)."""
    N, L, k = x.shape
    h = w1.shape[1]
    d = w2.shape[-1]
    M = N * L
    xf = x.reshape(M, k)

    # Row tile from a target step count: >= min_steps (both v7x TCs busy),
    # tiles <= tm_max rows, near-zero padded rows.
    n_steps = max(min_steps, _cdiv(M, tm_max))
    tm = _round_up(_cdiv(M, n_steps), 8)
    M_pad = _round_up(M, tm)
    if M_pad != M:
        xf = jnp.pad(xf, ((0, M_pad - M), (0, 0)))
    grid_m = M_pad // tm

    mxu_dtype = jnp.bfloat16 if use_bf16 else x.dtype

    # Block-diagonal layer-1 weight: W1_bd[i, j*h:(j+1)*h] = delta_ij * w1[j]
    # (feature-major columns, matching w2.reshape(k*h, d) below).
    w1bd = (jnp.eye(k, dtype=w1.dtype)[:, :, None] * w1[None, :, :])
    w1bd = w1bd.reshape(k, k * h).astype(mxu_dtype)
    b1f = b1.reshape(1, k * h)
    w2f = w2.reshape(k * h, d).astype(mxu_dtype)
    b2s = jnp.sum(b2, axis=0, keepdims=True)                 # (1, d)

    # Explicit VMEM budget (v7x: 64 MiB physical / 32 MiB scoped default;
    # v5e/v6e: 128 MiB).  Double-buffered tiles + f32 hidden + weights.
    esz = jnp.dtype(mxu_dtype).itemsize
    xsz = jnp.dtype(x.dtype).itemsize
    vmem_needed = (2 * tm * k * xsz                     # x tile (2 bufs)
                   + 2 * tm * d * xsz                   # out tile (2 bufs)
                   + tm * k * h * 4                     # h_all intermediate
                   + 2 * (k * (k * h) + (k * h) * d) * esz   # weights (2 bufs)
                   + 2 * ((k * h) + d) * 4)             # biases (2 bufs)
    vmem_limit = min(max(2 * vmem_needed, 32 * 1024 * 1024), 64 * 1024 * 1024)

    kernel = functools.partial(feature_embedding_kernel, mxu_dtype=mxu_dtype)

    out = pl.pallas_call(
        kernel,
        out_shape=jax.ShapeDtypeStruct((M_pad, d), x.dtype),
        grid_spec=pltpu.PrefetchScalarGridSpec(
            num_scalar_prefetch=0,
            grid=(grid_m,),
            in_specs=[
                pl.BlockSpec((tm, k), lambda m: (m, 0)),
                pl.BlockSpec((k, k * h), lambda m: (0, 0)),
                pl.BlockSpec((1, k * h), lambda m: (0, 0)),
                pl.BlockSpec((k * h, d), lambda m: (0, 0)),
                pl.BlockSpec((1, d), lambda m: (0, 0)),
            ],
            out_specs=pl.BlockSpec((tm, d), lambda m: (m, 0)),
        ),
        compiler_params=pltpu.CompilerParams(
            dimension_semantics=("parallel",),
            vmem_limit_bytes=vmem_limit),
    )(xf, w1bd, b1f, w2f, b2s)

    # Padded rows produce relu(b1)@w2 + b2_sum; they are discarded here.
    return out[:M].reshape(N, L, d)


def feature_embedding_ref(x, w1, b1, w2, b2):
    # Pure-JAX reference mirroring the PyTorch module.
    N, L, k = x.shape
    outs = []
    for i in range(k):
        f = x[:, :, i:i + 1]                                      # (N, L, 1)
        hdd = jnp.maximum(f * w1[i][None, None, :] + b1[i], 0.0)  # (N, L, H)
        e = jnp.einsum('nlh,hd->nld', hdd, w2[i]) + b2[i]         # (N, L, D)
        outs.append(e[:, :, None, :])
    return jnp.sum(jnp.concatenate(outs, axis=-2), axis=-2)       # (N, L, D)


if __name__ == "__main__":
    key = jax.random.PRNGKey(0)
    kx, kw1, kb1, kw2, kb2, kx2 = jax.random.split(key, 6)

    # Small shapes consistent with the module's forward: x is (N, L, k).
    N, L, k = 2, 8, 4
    hidden, d = 32, 32

    x = jax.random.normal(kx, (N, L, k), dtype=jnp.float32)
    # Per-feature MLP(1 -> hidden -> d) parameters, stacked over k.
    w1 = jax.random.normal(kw1, (k, hidden), dtype=jnp.float32) * 0.5
    b1 = jax.random.normal(kb1, (k, hidden), dtype=jnp.float32) * 0.1
    w2 = jax.random.normal(kw2, (k, hidden, d), dtype=jnp.float32) * (1.0 / hidden ** 0.5)
    b2 = jax.random.normal(kb2, (k, d), dtype=jnp.float32) * 0.1

    # Check 1: small case, f32 MXU operands (exact module numerics).
    out = jax.block_until_ready(feature_embedding(x, w1, b1, w2, b2))
    ref = feature_embedding_ref(x, w1, b1, w2, b2)
    assert out.shape == (N, L, d)
    assert jnp.allclose(out, ref, atol=1e-4, rtol=1e-4), "mismatch vs reference (small)"

    # Check 2: multi-tile path with a non-multiple row count (M = 1200 -> 2 tiles of 600).
    N2, L2 = 4, 300
    x2 = jax.random.normal(kx2, (N2, L2, k), dtype=jnp.float32)
    out2 = jax.block_until_ready(feature_embedding(x2, w1, b1, w2, b2))
    ref2 = feature_embedding_ref(x2, w1, b1, w2, b2)
    assert out2.shape == (N2, L2, d)
    assert jnp.allclose(out2, ref2, atol=1e-4, rtol=1e-4), "mismatch vs reference (tiled)"

    # Check 3: bf16 MXU operands (production fast path), looser tolerance.
    out3 = jax.block_until_ready(feature_embedding(x2, w1, b1, w2, b2, use_bf16=True))
    assert jnp.allclose(out3, ref2, atol=8e-2, rtol=5e-2), "mismatch vs reference (bf16)"

    print("KERNEL_OK")
</pallas_src>

<mosaic_0001>
module attributes {stable_mosaic.version = 11 : i64} {
  func.func @feature_embedding_kernel(%arg0: i32, %arg1: memref<8x4xf32, #tpu.memory_space<vmem>>, %arg2: memref<4x128xf32, #tpu.memory_space<vmem>>, %arg3: memref<1x128xf32, #tpu.memory_space<vmem>>, %arg4: memref<128x32xf32, #tpu.memory_space<vmem>>, %arg5: memref<1x32xf32, #tpu.memory_space<vmem>>, %arg6: memref<8x32xf32, #tpu.memory_space<vmem>>) attributes {dimension_semantics = [#tpu.dimension_semantics<parallel>], iteration_bounds = array<i64: 2>, scalar_prefetch = 0 : i64, scratch_operands = 0 : i64, tpu.core_type = #tpu.core_type<tc>, window_params = [{transform_indices = @transform_0, window_bounds = array<i64: 8, 4>}, {pipeline_mode = #tpu.pipeline_mode<synchronous>, transform_indices = @transform_1, window_bounds = array<i64: 4, 128>}, {pipeline_mode = #tpu.pipeline_mode<synchronous>, transform_indices = @transform_2, window_bounds = array<i64: 1, 128>}, {pipeline_mode = #tpu.pipeline_mode<synchronous>, transform_indices = @transform_3, window_bounds = array<i64: 128, 32>}, {pipeline_mode = #tpu.pipeline_mode<synchronous>, transform_indices = @transform_4, window_bounds = array<i64: 1, 32>}, {transform_indices = @transform_5, window_bounds = array<i64: 8, 32>}]} {
    %c0 = arith.constant 0 : index
    %c0_0 = arith.constant 0 : index
    %0 = vector.load %arg1[%c0, %c0_0] : memref<8x4xf32, #tpu.memory_space<vmem>>, vector<8x4xf32>
    %c0_1 = arith.constant 0 : index
    %c0_2 = arith.constant 0 : index
    %1 = vector.load %arg2[%c0_1, %c0_2] : memref<4x128xf32, #tpu.memory_space<vmem>>, vector<4x128xf32>
    %cst = arith.constant dense<0.000000e+00> : vector<8x128xf32>
    %2 = tpu.matmul %0, %1, %cst {dimension_numbers = #tpu.dot_dimension_numbers<[1], [0], [0], [1], [0, 0, 1, 1], [], []>} : vector<8x4xf32>, vector<4x128xf32>, vector<8x128xf32> -> vector<8x128xf32>
    %c0_3 = arith.constant 0 : index
    %c0_4 = arith.constant 0 : index
    %3 = vector.load %arg3[%c0_3, %c0_4] : memref<1x128xf32, #tpu.memory_space<vmem>>, vector<1x128xf32>
    %4 = vector.broadcast %3 : vector<1x128xf32> to vector<8x128xf32>
    %5 = arith.addf %2, %4 : vector<8x128xf32>
    %cst_5 = arith.constant 0.000000e+00 : f32
    %6 = vector.broadcast %cst_5 : f32 to vector<8x128xf32>
    %7 = arith.maximumf %5, %6 : vector<8x128xf32>
    %c0_6 = arith.constant 0 : index
    %c0_7 = arith.constant 0 : index
    %8 = vector.load %arg4[%c0_6, %c0_7] : memref<128x32xf32, #tpu.memory_space<vmem>>, vector<128x32xf32>
    %cst_8 = arith.constant dense<0.000000e+00> : vector<8x32xf32>
    %9 = tpu.matmul %7, %8, %cst_8 {dimension_numbers = #tpu.dot_dimension_numbers<[1], [0], [0], [1], [0, 0, 1, 1], [], []>} : vector<8x128xf32>, vector<128x32xf32>, vector<8x32xf32> -> vector<8x32xf32>
    %c0_9 = arith.constant 0 : index
    %c0_10 = arith.constant 0 : index
    %10 = vector.load %arg5[%c0_9, %c0_10] : memref<1x32xf32, #tpu.memory_space<vmem>>, vector<1x32xf32>
    %11 = vector.broadcast %10 : vector<1x32xf32> to vector<8x32xf32>
    %12 = arith.addf %9, %11 : vector<8x32xf32>
    %c0_11 = arith.constant 0 : index
    %c0_12 = arith.constant 0 : index
    %13 = vector.load %arg6[%c0_11, %c0_12] : memref<8x32xf32, #tpu.memory_space<vmem>>, vector<8x32xf32>
    tpu.vector_store %arg6[%c0_11, %c0_12], %12 {strides = array<i32>} : memref<8x32xf32, #tpu.memory_space<vmem>>, vector<8x32xf32>,
    return
  }
  func.func @transform_0(%arg0: i32) -> (i32, i32) {
    %c0_i32 = arith.constant 0 : i32
    %c0_i32_0 = arith.constant 0 : i32
    return %arg0, %c0_i32 : i32, i32
  }
  func.func @transform_1(%arg0: i32) -> (i32, i32) {
    %c0_i32 = arith.constant 0 : i32
    %c0_i32_0 = arith.constant 0 : i32
    %c0_i32_1 = arith.constant 0 : i32
    return %c0_i32, %c0_i32_0 : i32, i32
  }
  func.func @transform_2(%arg0: i32) -> (i32, i32) {
    %c0_i32 = arith.constant 0 : i32
    %c0_i32_0 = arith.constant 0 : i32
    %c0_i32_1 = arith.constant 0 : i32
    return %c0_i32, %c0_i32_0 : i32, i32
  }
  func.func @transform_3(%arg0: i32) -> (i32, i32) {
    %c0_i32 = arith.constant 0 : i32
    %c0_i32_0 = arith.constant 0 : i32
    %c0_i32_1 = arith.constant 0 : i32
    return %c0_i32, %c0_i32_0 : i32, i32
  }
  func.func @transform_4(%arg0: i32) -> (i32, i32) {
    %c0_i32 = arith.constant 0 : i32
    %c0_i32_0 = arith.constant 0 : i32
    %c0_i32_1 = arith.constant 0 : i32
    return %c0_i32, %c0_i32_0 : i32, i32
  }
  func.func @transform_5(%arg0: i32) -> (i32, i32) {
    %c0_i32 = arith.constant 0 : i32
    %c0_i32_0 = arith.constant 0 : i32
    return %arg0, %c0_i32 : i32, i32
  }
}

</mosaic_0001>

<llo_original>
// kernel: tpu_custom_call.1
$region0: #{tpu_custom_call.1}
  #allocation0 [shape = 'u32[]', space=smem, size = 0x4, offset = 0x4, fixed_abs, tag = 'smem constant byte address 0x4 - core index']
  #allocation1 [shape = 'u32[144,128]{1,0:T(1,128)}', space=vmem, size = 0x12000, scoped, tag = 'internal scratch']
  %s0 = inlined_call_operand.vmem [shape: f32[16,4], index: 0, kind: input, shape index: {}]
  %s1 = inlined_call_operand.vmem [shape: f32[4,128], index: 1, kind: input, shape index: {}]
  %s2 = inlined_call_operand.vmem [shape: f32[1,128], index: 2, kind: input, shape index: {}]
  %s3 = inlined_call_operand.vmem [shape: f32[128,32], index: 3, kind: input, shape index: {}]
  %s4 = inlined_call_operand.vmem [shape: f32[1,32], index: 4, kind: input, shape index: {}]
  %s5 = inlined_call_operand.hbm [shape: f32[16,32], index: 5, kind: output, shape index: {}]
  %s6 = sld [smem:[#allocation0]]
  $region53: #{tpu_custom_call.1} parent=0
    _
  %s8 = ssub.s32 1, %s6
  %s9 = scalar_select 0, %s8, %s6
  $region1: #{tpu_custom_call.1} parent=0
    #allocation2 [shape = 'u8[8192]{0}', space=vmem, size = 0x2000, scoped, tag = 'output window, operand 0']
    #allocation3 [shape = 's32[2]{0}', space=sflag, size = 0x8, scoped, tag = 'scoped memory for tpu_custom_call.1']
    %10 = vsyncpa [#allocation3], 0
    %s11 = scalar_lea.sflag [#allocation3], 1
    %12 = vsyncpa %s11, 0
    loop: start=0, step=1, limit=4
    $region2: #{tpu_custom_call.1} parent=1 // loop_pre_header
      _
    $region3: #{tpu_custom_call.1} parent=1 // loop_header
      %s14 = sphi 0, %s18
      %p15 = scmp.ge.s32.totalorder %s14, 4
      %s24 = sphi 0, %s26
      %s27 = sphi 0, %s24
      %s28 = sphi 0, %s27
      %s44 = sphi 0, %s28
      %s48 = sphi 0, %s48
      %s50 = sphi 0, %s48
      %s51 = sphi 0, %s50
      %s65 = sphi 0, %s51
      %s69 = sphi 0, %s69
      %s71 = sphi 0, %s69
      %s72 = sphi 0, %s71
      %s86 = sphi 0, %s72
      %s90 = sphi 0, %s90
      %s92 = sphi 0, %s90
      %s93 = sphi 0, %s92
      %s107 = sphi 0, %s93
      %s111 = sphi 0, %s111
      %s113 = sphi 0, %s111
      %s114 = sphi 0, %s113
      %s128 = sphi 0, %s114
      %s134 = sphi 0, %s136
      %s137 = sphi 0, %s134
      %s138 = sphi 0, %s137
      %s154 = sphi 0, %s138
    $region4: #{tpu_custom_call.1} parent=1 // loop_header_branch
      %17 = sbr.rel (%p15) target = $region8
    $region5: #{tpu_custom_call.1} parent=1 // loop_body
      %s19 = ssub.s32 %s14, 1
      %s20 = ssub.s32 %s14, 2
      %s21 = sadd.s32 %s14, 1
      %s22 = ssub.s32 %s14, %s21
      %p23 = scmp.eq.s32.totalorder %s22, 0
      %s25 = sadd.s32 %s24, 1
      %s26 = scalar_select %p23, %s24, %s25
      %p29 = pneg %p23
      %p30 = scmp.eq.s32.totalorder %s14, 1
      %p31 = por %p29, %p30
      %p32 = scmp.ne.s32.totalorder %s24, %s27
      %p33 = scmp.eq.s32.totalorder %s14, 0
      %p34 = por %p32, %p33
      %p35 = scmp.ne.s32.totalorder %s24, %s27
      %p36 = scmp.eq.s32.totalorder %s19, 1
      %p37 = por %p35, %p36
      %p38 = scmp.ne.s32.totalorder %s27, %s28
      %p39 = scmp.eq.s32.totalorder %s19, 0
      %p40 = por %p38, %p39
      %p41 = scmp.ne.s32.totalorder %s27, %s28
      %p42 = scmp.eq.s32.totalorder %s20, 1
      %p43 = por %p41, %p42
      %p45 = scmp.ne.s32.totalorder %s28, %s44
      %p46 = scmp.eq.s32.totalorder %s20, 0
      %p47 = por %p45, %p46
      %s49 = sadd.s32 %s48, 1
      %p52 = scmp.eq.s32.totalorder %s14, 1
      %p53 = scmp.ne.s32.totalorder %s48, %s50
      %p54 = scmp.eq.s32.totalorder %s14, 0
      %p55 = por %p53, %p54
      %p56 = scmp.ne.s32.totalorder %s48, %s50
      %p57 = scmp.eq.s32.totalorder %s19, 1
      %p58 = por %p56, %p57
      %p59 = scmp.ne.s32.totalorder %s50, %s51
      %p60 = scmp.eq.s32.totalorder %s19, 0
      %p61 = por %p59, %p60
      %p62 = scmp.ne.s32.totalorder %s50, %s51
      %p63 = scmp.eq.s32.totalorder %s20, 1
      %p64 = por %p62, %p63
      %p66 = scmp.ne.s32.totalorder %s51, %s65
      %p67 = scmp.eq.s32.totalorder %s20, 0
      %p68 = por %p66, %p67
      %s70 = sadd.s32 %s69, 1
      %p73 = scmp.eq.s32.totalorder %s14, 1
      %p74 = scmp.ne.s32.totalorder %s69, %s71
      %p75 = scmp.eq.s32.totalorder %s14, 0
      %p76 = por %p74, %p75
      %p77 = scmp.ne.s32.totalorder %s69, %s71
      %p78 = scmp.eq.s32.totalorder %s19, 1
      %p79 = por %p77, %p78
      %p80 = scmp.ne.s32.totalorder %s71, %s72
      %p81 = scmp.eq.s32.totalorder %s19, 0
      %p82 = por %p80, %p81
      %p83 = scmp.ne.s32.totalorder %s71, %s72
      %p84 = scmp.eq.s32.totalorder %s20, 1
      %p85 = por %p83, %p84
      %p87 = scmp.ne.s32.totalorder %s72, %s86
      %p88 = scmp.eq.s32.totalorder %s20, 0
      %p89 = por %p87, %p88
      %s91 = sadd.s32 %s90, 1
      %p94 = scmp.eq.s32.totalorder %s14, 1
      %p95 = scmp.ne.s32.totalorder %s90, %s92
      %p96 = scmp.eq.s32.totalorder %s14, 0
      %p97 = por %p95, %p96
      %p98 = scmp.ne.s32.totalorder %s90, %s92
      %p99 = scmp.eq.s32.totalorder %s19, 1
      %p100 = por %p98, %p99
      %p101 = scmp.ne.s32.totalorder %s92, %s93
      %p102 = scmp.eq.s32.totalorder %s19, 0
      %p103 = por %p101, %p102
      %p104 = scmp.ne.s32.totalorder %s92, %s93
      %p105 = scmp.eq.s32.totalorder %s20, 1
      %p106 = por %p104, %p105
      %p108 = scmp.ne.s32.totalorder %s93, %s107
      %p109 = scmp.eq.s32.totalorder %s20, 0
      %p110 = por %p108, %p109
      %s112 = sadd.s32 %s111, 1
      %p115 = scmp.eq.s32.totalorder %s14, 1
      %p116 = scmp.ne.s32.totalorder %s111, %s113
      %p117 = scmp.eq.s32.totalorder %s14, 0
      %p118 = por %p116, %p117
      %p119 = scmp.ne.s32.totalorder %s111, %s113
      %p120 = scmp.eq.s32.totalorder %s19, 1
      %p121 = por %p119, %p120
      %p122 = scmp.ne.s32.totalorder %s113, %s114
      %p123 = scmp.eq.s32.totalorder %s19, 0
      %p124 = por %p122, %p123
      %p125 = scmp.ne.s32.totalorder %s113, %s114
      %p126 = scmp.eq.s32.totalorder %s20, 1
      %p127 = por %p125, %p126
      %p129 = scmp.ne.s32.totalorder %s114, %s128
      %p130 = scmp.eq.s32.totalorder %s20, 0
      %p131 = por %p129, %p130
      %s132 = ssub.s32 %s14, %s21
      %p133 = scmp.eq.s32.totalorder %s132, 0
      %s135 = sadd.s32 %s134, 1
      %s136 = scalar_select %p133, %s134, %s135
      %p139 = pneg %p133
      %p140 = scmp.eq.s32.totalorder %s14, 1
      %p141 = por %p139, %p140
      %p142 = scmp.ne.s32.totalorder %s134, %s137
      %p143 = scmp.eq.s32.totalorder %s14, 0
      %p144 = por %p142, %p143
      %p145 = scmp.ne.s32.totalorder %s134, %s137
      %p146 = scmp.eq.s32.totalorder %s19, 1
      %p147 = por %p145, %p146
      %p148 = scmp.ne.s32.totalorder %s137, %s138
      %p149 = scmp.eq.s32.totalorder %s19, 0
      %p150 = por %p148, %p149
      %p151 = scmp.ne.s32.totalorder %s137, %s138
      %p152 = scmp.eq.s32.totalorder %s20, 1
      %p153 = por %p151, %p152
      %p155 = scmp.ne.s32.totalorder %s138, %s154
      %p156 = scmp.eq.s32.totalorder %s20, 0
      %p157 = por %p155, %p156
      %p158 = scmp.le.s32.totalorder 1, %s14
      %p159 = scmp.lt.s32.totalorder %s14, 3
      %p160 = pnand %p158, %p159
      %p161 = pneg %p160
      // Predicated region
      $region9: #{tpu_custom_call.1} parent=5 // pred_check
        _
      $region10: #{tpu_custom_call.1} parent=5 // pred_check_branch
        %163 = sbr.rel (%p160) target = $region12
      $region11: #{tpu_custom_call.1} parent=5 // pred_region
        %s164 = ssub.s32 %s14, 1
        // Predicated region
        $region13: #{tpu_custom_call.1} parent=11 // pred_check
          %p165 = pneg %p61
        $region14: #{tpu_custom_call.1} parent=11 // pred_check_branch
          %167 = sbr.rel (%p165) target = $region16
        $region15: #{tpu_custom_call.1} parent=11 // pred_region
          _
        $region16: #{tpu_custom_call.1} parent=11 // pred_fallthru
          _
        // Predicated region
        $region17: #{tpu_custom_call.1} parent=11 // pred_check
          %p168 = pneg %p82
        $region18: #{tpu_custom_call.1} parent=11 // pred_check_branch
          %170 = sbr.rel (%p168) target = $region20
        $region19: #{tpu_custom_call.1} parent=11 // pred_region
          _
        $region20: #{tpu_custom_call.1} parent=11 // pred_fallthru
          _
        // Predicated region
        $region21: #{tpu_custom_call.1} parent=11 // pred_check
          %p171 = pneg %p103
        $region22: #{tpu_custom_call.1} parent=11 // pred_check_branch
          %173 = sbr.rel (%p171) target = $region24
        $region23: #{tpu_custom_call.1} parent=11 // pred_region
          _
        $region24: #{tpu_custom_call.1} parent=11 // pred_fallthru
          _
        // Predicated region
        $region25: #{tpu_custom_call.1} parent=11 // pred_check
          %p174 = pneg %p124
        $region26: #{tpu_custom_call.1} parent=11 // pred_check_branch
          %176 = sbr.rel (%p174) target = $region28
        $region27: #{tpu_custom_call.1} parent=11 // pred_region
          _
        $region28: #{tpu_custom_call.1} parent=11 // pred_fallthru
          _
      $region12: #{tpu_custom_call.1} parent=5 // pred_fallthru
        _
      %p177 = scmp.lt.s32.totalorder %s14, 2
      // Predicated region
      $region29: #{tpu_custom_call.1} parent=5 // pred_check
        %p178 = pneg %p177
      $region30: #{tpu_custom_call.1} parent=5 // pred_check_branch
        %180 = sbr.rel (%p178) target = $region32
      $region31: #{tpu_custom_call.1} parent=5 // pred_region
        // Predicated region
        $region33: #{tpu_custom_call.1} parent=31 // pred_check
          %p181 = pneg %p34
        $region34: #{tpu_custom_call.1} parent=31 // pred_check_branch
          %183 = sbr.rel (%p181) target = $region36
        $region35: #{tpu_custom_call.1} parent=31 // pred_region
          %p184 = scmp.lt.s32.totalorder %s14, 1
          %s185 = scalar_select %p184, %s14, 1
          %s186 = smul.addr %s185, 8
          %s187 = scalar_lea.vmem %s0, %s186
        $region36: #{tpu_custom_call.1} parent=31 // pred_fallthru
          _
      $region32: #{tpu_custom_call.1} parent=5 // pred_fallthru
        _
      %p188 = scmp.le.s32.totalorder 1, %s14
      %p189 = scmp.lt.s32.totalorder %s14, 3
      %p190 = pnand %p188, %p189
      %p191 = pneg %p190
      // Predicated region
      $region37: #{tpu_custom_call.1} parent=5 // pred_check
        _
      $region38: #{tpu_custom_call.1} parent=5 // pred_check_branch
        %193 = sbr.rel (%p190) target = $region40
      $region39: #{tpu_custom_call.1} parent=5 // pred_region
        %s194 = ssub.s32 %s14, 1
        %p195 = scmp.lt.s32.totalorder %s19, 1
        %s196 = scalar_select %p195, %s19, 1
        %s197 = smul.addr %s196, 8
        %s198 = scalar_lea.vmem %s0, %s197
        %p199 = pneg %p40
        %p200 = pneg %p37
        %p201 = pneg %p61
        %p202 = pneg %p58
        %p203 = pneg %p82
        %p204 = pneg %p79
        %p205 = pneg %p103
        %p206 = pneg %p100
        %p207 = pneg %p124
        %p208 = pneg %p121
        %p209 = pneg %p150
        %p210 = pneg %p147
        %s211 = sand.u32 %s137, 1
        %s212 = scalar_lea.sflag [#allocation3], %s211
        %s213 = sand.u32 %s137, 1
        %s214 = smul.addr %s213, 8
        %s215 = scalar_lea.vmem [#allocation2], %s214
        %p216 = scmp.lt.s32.totalorder %s19, 1
        %s217 = scalar_select %p216, %s19, 1
        %s218 = smul.addr %s217, 8
        %s219 = scalar_lea.vmem %s0, %s218
        %v220 = vld [vmem:[%s219] sm:$0xff]
        %v221 = vld [vmem:[%s1] sm:$0xf]
        %v222 = vld [vmem:[%s2] sm:$0x1]
        %v224 = vlaneseq
        %v225 = vshrl.u32 %v224, 7
        %v226 = vsub.s32 0, %v225
        %v227 = vrot.slane %v222, %v226
        %vm229 = vcmask 31744
        %v231 = vsel %vm229, %v220, 0
        %vm233 = vcmask 1043456
        %v235 = vsel %vm233, %v221, 0
        %237 = vmatprep.subr.mxu0 0.0
        %238 = vmatpush1.msra.mxu0 0.0
        %239 = vmatprep.subr.mxu0 0.0
        %240 = vmatpush1.msra.mxu0 0.0
        %241 = vmatprep.subr.mxu0 0.0
        %242 = vmatpush1.msra.mxu0 0.0
        %243 = vmatprep.subr.mxu0 0.0
        %244 = vmatpush1.msra.mxu0 0.0
        %245 = vmatprep.subr.mxu0 0.0
        %246 = vmatpush1.msra.mxu0 0.0
        %247 = vmatprep.subr.mxu0 0.0
        %248 = vmatpush1.msra.mxu0 0.0
        %249 = vmatprep.subr.mxu0 0.0
        %250 = vmatpush1.msra.mxu0 0.0
        %251 = vmatprep.subr.mxu0 0.0
        %252 = vmatpush1.msra.mxu0 0.0
        %253 = vmatprep.subr.mxu0 0.0
        %254 = vmatpush1.msra.mxu0 0.0
        %255 = vmatprep.subr.mxu0 0.0
        %256 = vmatpush1.msra.mxu0 0.0
        %257 = vmatprep.subr.mxu0 0.0
        %258 = vmatpush1.msra.mxu0 0.0
        %259 = vmatprep.subr.mxu0 0.0
        %260 = vmatpush1.msra.mxu0 0.0
        %261 = vmatprep.subr.mxu0 0.0
        %262 = vmatpush1.msra.mxu0 0.0
        %263 = vmatprep.subr.mxu0 0.0
        %264 = vmatpush1.msra.mxu0 0.0
        %265 = vmatprep.subr.mxu0 0.0
        %266 = vmatpush1.msra.mxu0 0.0
        %267 = vmatprep.subr.mxu0 0.0
        %268 = vmatpush1.msra.mxu0 %v235
        %269 = vmatprep.subr.mxu0 0.0
        %270 = vmatpush2.msra.mxu0 0.0
        %271 = vmatprep.subr.mxu0 0.0
        %272 = vmatpush2.msra.mxu0 0.0
        %273 = vmatprep.subr.mxu0 0.0
        %274 = vmatpush2.msra.mxu0 0.0
        %275 = vmatprep.subr.mxu0 0.0
        %276 = vmatpush2.msra.mxu0 0.0
        %277 = vmatprep.subr.mxu0 0.0
        %278 = vmatpush2.msra.mxu0 0.0
        %279 = vmatprep.subr.mxu0 0.0
        %280 = vmatpush2.msra.mxu0 0.0
        %281 = vmatprep.subr.mxu0 0.0
        %282 = vmatpush2.msra.mxu0 0.0
        %283 = vmatprep.subr.mxu0 0.0
        %284 = vmatpush2.msra.mxu0 0.0
        %285 = vmatprep.subr.mxu0 0.0
        %286 = vmatpush2.msra.mxu0 0.0
        %287 = vmatprep.subr.mxu0 0.0
        %288 = vmatpush2.msra.mxu0 0.0
        %289 = vmatprep.subr.mxu0 0.0
        %290 = vmatpush2.msra.mxu0 0.0
        %291 = vmatprep.subr.mxu0 0.0
        %292 = vmatpush2.msra.mxu0 0.0
        %293 = vmatprep.subr.mxu0 0.0
        %294 = vmatpush2.msra.mxu0 0.0
        %295 = vmatprep.subr.mxu0 0.0
        %296 = vmatpush2.msra.mxu0 0.0
        %297 = vmatprep.subr.mxu0 0.0
        %298 = vmatpush2.msra.mxu0 0.0
        %299 = vmatprep.subr.mxu0 0.0
        %300 = vmatpush2.msra.mxu0 0.0
        %301 = vmatprep.mubr.f32.mxu0 0.0
        %302 = vmatmul.mubr.f32.gmra.mxu0 %v231
        %v303 = vpop.f32.mrf.mxu0
        %v304 = vadd.f32 %v227, %v303
        %v305 = vpop.f32.mrf.mxu0
        %306 = vdwg.mxu0
        %v307 = vmax.f32 %v304, 0.0
        %v308 = vld [vmem:[%s3] sm:$0xff]
        %v309 = vld [vmem:[%s3 + $0x8] sm:$0xff]
        %v310 = vld [vmem:[%s3 + $0x10] sm:$0xff]
        %v311 = vld [vmem:[%s3 + $0x18] sm:$0xff]
        %v312 = vld [vmem:[%s3 + $0x20] sm:$0xff]
        %v313 = vld [vmem:[%s3 + $0x28] sm:$0xff]
        %v314 = vld [vmem:[%s3 + $0x30] sm:$0xff]
        %v315 = vld [vmem:[%s3 + $0x38] sm:$0xff]
        %v316 = vld [vmem:[%s3 + $0x40] sm:$0xff]
        %v317 = vld [vmem:[%s3 + $0x48] sm:$0xff]
        %v318 = vld [vmem:[%s3 + $0x50] sm:$0xff]
        %v319 = vld [vmem:[%s3 + $0x58] sm:$0xff]
        %v320 = vld [vmem:[%s3 + $0x60] sm:$0xff]
        %v321 = vld [vmem:[%s3 + $0x68] sm:$0xff]
        %v322 = vld [vmem:[%s3 + $0x70] sm:$0xff]
        %v323 = vld [vmem:[%s3 + $0x78] sm:$0xff]
        %v324 = vld [vmem:[%s4] sm:$0x1]
        %v326 = vlaneseq
        %v327 = vshrl.u32 %v326, 7
        %v328 = vsub.s32 0, %v327
        %v329 = vrot.slane %v324, %v328
        %331 = vmatprep.subr.mxu0 0.0
        %332 = vmatpush1.msra.mxu0 %v323
        %333 = vmatprep.subr.mxu0 0.0
        %334 = vmatpush1.msra.mxu0 %v322
        %335 = vmatprep.subr.mxu0 0.0
        %336 = vmatpush1.msra.mxu0 %v321
        %337 = vmatprep.subr.mxu0 0.0
        %338 = vmatpush1.msra.mxu0 %v320
        %339 = vmatprep.subr.mxu0 0.0
        %340 = vmatpush1.msra.mxu0 %v319
        %341 = vmatprep.subr.mxu0 0.0
        %342 = vmatpush1.msra.mxu0 %v318
        %343 = vmatprep.subr.mxu0 0.0
        %344 = vmatpush1.msra.mxu0 %v317
        %345 = vmatprep.subr.mxu0 0.0
        %346 = vmatpush1.msra.mxu0 %v316
        %347 = vmatprep.subr.mxu0 0.0
        %348 = vmatpush1.msra.mxu0 %v315
        %349 = vmatprep.subr.mxu0 0.0
        %350 = vmatpush1.msra.mxu0 %v314
        %351 = vmatprep.subr.mxu0 0.0
        %352 = vmatpush1.msra.mxu0 %v313
        %353 = vmatprep.subr.mxu0 0.0
        %354 = vmatpush1.msra.mxu0 %v312
        %355 = vmatprep.subr.mxu0 0.0
        %356 = vmatpush1.msra.mxu0 %v311
        %357 = vmatprep.subr.mxu0 0.0
        %358 = vmatpush1.msra.mxu0 %v310
        %359 = vmatprep.subr.mxu0 0.0
        %360 = vmatpush1.msra.mxu0 %v309
        %361 = vmatprep.subr.mxu0 0.0
        %362 = vmatpush1.msra.mxu0 %v308
        %363 = vmatprep.subr.mxu0 0.0
        %364 = vmatpush2.msra.mxu0 0.0
        %365 = vmatprep.subr.mxu0 0.0
        %366 = vmatpush2.msra.mxu0 0.0
        %367 = vmatprep.subr.mxu0 0.0
        %368 = vmatpush2.msra.mxu0 0.0
        %369 = vmatprep.subr.mxu0 0.0
        %370 = vmatpush2.msra.mxu0 0.0
        %371 = vmatprep.subr.mxu0 0.0
        %372 = vmatpush2.msra.mxu0 0.0
        %373 = vmatprep.subr.mxu0 0.0
        %374 = vmatpush2.msra.mxu0 0.0
        %375 = vmatprep.subr.mxu0 0.0
        %376 = vmatpush2.msra.mxu0 0.0
        %377 = vmatprep.subr.mxu0 0.0
        %378 = vmatpush2.msra.mxu0 0.0
        %379 = vmatprep.subr.mxu0 0.0
        %380 = vmatpush2.msra.mxu0 0.0
        %381 = vmatprep.subr.mxu0 0.0
        %382 = vmatpush2.msra.mxu0 0.0
        %383 = vmatprep.subr.mxu0 0.0
        %384 = vmatpush2.msra.mxu0 0.0
        %385 = vmatprep.subr.mxu0 0.0
        %386 = vmatpush2.msra.mxu0 0.0
        %387 = vmatprep.subr.mxu0 0.0
        %388 = vmatpush2.msra.mxu0 0.0
        %389 = vmatprep.subr.mxu0 0.0
        %390 = vmatpush2.msra.mxu0 0.0
        %391 = vmatprep.subr.mxu0 0.0
        %392 = vmatpush2.msra.mxu0 0.0
        %393 = vmatprep.subr.mxu0 0.0
        %394 = vmatpush2.msra.mxu0 0.0
        %395 = vmatprep.mubr.f32.mxu0 0.0
        %396 = vmatmul.mubr.f32.gmra.mxu0 %v307
        %v397 = vpop.f32.mrf.mxu0
        %v398 = vadd.f32 %v329, %v397
        %v399 = vpop.f32.mrf.mxu0
        %400 = vdwg.mxu0
        %vm401 = vcmask 261120
        %402 = vst.msk [vmem:[%s215] sm:$0xff] %vm401, %v398
        %s403 = sand.u32 %s137, 1
        %s404 = scalar_lea.sflag [#allocation3], %s403
        %s405 = sand.u32 %s137, 1
        %s406 = smul.addr %s405, 8
        %s407 = scalar_lea.vmem [#allocation2], %s406
        // Predicated region
        $region41: #{tpu_custom_call.1} parent=39 // pred_check
          %p408 = pneg %p147
        $region42: #{tpu_custom_call.1} parent=39 // pred_check_branch
          %410 = sbr.rel (%p408) target = $region44
        $region43: #{tpu_custom_call.1} parent=39 // pred_region
          %s412 = ssub.s32 128, 128
          %413 = vsyncadd %s404, %s412
          %s414 = smul.addr %s19, 128
          %s415 = scalar_lea.hbm %s5, %s414
          %s417 = sshll.u32 %s407, 4
          %s418 = int_to_ptr.vmem [resolvable:$true] %s417
          %420 = dma.vmem_to_hbm [thread:$0]  %s418, 128, %s415, %s404
        $region44: #{tpu_custom_call.1} parent=39 // pred_fallthru
          _
      $region40: #{tpu_custom_call.1} parent=5 // pred_fallthru
        _
      %p421 = scmp.le.s32.totalorder 2, %s14
      // Predicated region
      $region45: #{tpu_custom_call.1} parent=5 // pred_check
        %p422 = pneg %p421
      $region46: #{tpu_custom_call.1} parent=5 // pred_check_branch
        %424 = sbr.rel (%p422) target = $region48
      $region47: #{tpu_custom_call.1} parent=5 // pred_region
        %s425 = ssub.s32 %s14, 2
        // Predicated region
        $region49: #{tpu_custom_call.1} parent=47 // pred_check
          %p426 = pneg %p153
        $region50: #{tpu_custom_call.1} parent=47 // pred_check_branch
          %428 = sbr.rel (%p426) target = $region52
        $region51: #{tpu_custom_call.1} parent=47 // pred_region
          %s429 = sand.u32 %s138, 1
          %s430 = scalar_lea.sflag [#allocation3], %s429
          %s431 = sand.u32 %s138, 1
          %s432 = smul.addr %s431, 8
          %s433 = scalar_lea.vmem [#allocation2], %s432
          %434 = dma.done %s430, 128
        $region52: #{tpu_custom_call.1} parent=47 // pred_fallthru
          _
      $region48: #{tpu_custom_call.1} parent=5 // pred_fallthru
        _
    $region6: #{tpu_custom_call.1} parent=1 // loop_footer
      %s18 = sadd.s32 1, %s14
    $region7: #{tpu_custom_call.1} parent=1 // loop_footer_branch
      %13 = sbr.rel target = $region3
    $region8: #{tpu_custom_call.1} parent=1 // loop_exit
      _
    %435 = vsyncpa [#allocation3], 1
    %s436 = scalar_lea.sflag [#allocation3], 1
    %437 = vsyncpa %s436, 1

</llo_original>
